<compile_context>
chip_gen: v7x
topology: tpu7x:2x2x1
jax: 0.10.0
libtpu: 0.0.40
codegen_flags: <defaults>
</compile_context>

<pallas_src>
import jax
import jax.numpy as jnp
from jax.experimental import pallas as pl
from jax.experimental.pallas import tpu as pltpu

HIDDEN = 20
NUM_LAYERS = 10


def _round_up(x, m):
    return (x + m - 1) // m * m


def mlp8_kernel(xT_ref, w_ref, b_ref, outT_ref):
    # xT_ref  : (D_PAD, TB)          f32   features on sublanes, batch on lanes
    # w_ref   : (10, D_PAD, D_PAD)   bf16  layer i weight stored as (out, in)
    # b_ref   : (10, D_PAD, 1)       f32
    # outT_ref: (D_PAD, TB)          f32
    h = xT_ref[...]                                   # f32
    for i in range(NUM_LAYERS):                       # fully unrolled (static)
        if i > 0:
            h = jnp.tanh(h)                           # lane-dense, f32 on EUP
        w = w_ref[i]                                  # (D_PAD, D_PAD) bf16
        b = b_ref[i]                                  # (D_PAD, 1)     f32
        # h^T_next = W^T @ h^T + b ; MXU N-dim == batch tile, f32 accumulate.
        h = jnp.dot(w, h.astype(jnp.bfloat16),
                    preferred_element_type=jnp.float32) + b
    outT_ref[...] = h                                 # lane-dense store


def mlp8_forward(x, weights, biases, *, tb=1024):
    """x: (B, num_inputs); weights[i]: (in_i, out_i); biases[i]: (out_i,)."""
    B, num_inputs = x.shape
    num_outputs = weights[-1].shape[1]
    dims = [w.shape[0] for w in weights] + [num_outputs]
    d_pad = _round_up(max(dims), 16)          # sublane-aligned for f32 & bf16

    # --- pack parameters into two slabs (zero-padded) -----------------------
    w_slab = jnp.zeros((NUM_LAYERS, d_pad, d_pad), jnp.float32)
    b_slab = jnp.zeros((NUM_LAYERS, d_pad, 1), jnp.float32)
    for i, (w, b) in enumerate(zip(weights, biases)):
        di, do = w.shape
        w_slab = w_slab.at[i, :do, :di].set(w.T)          # store (out, in)
        b_slab = b_slab.at[i, :do, 0].set(b.reshape(-1))
    w_slab = w_slab.astype(jnp.bfloat16)
    # Note: zero-padded rows/cols keep padded activation lanes exactly 0
    # through every layer (tanh(0) == 0), so slicing the result is exact.

    # --- batch on the lane axis: pad x^T to (d_pad, B_pad) ------------------
    tb = _round_up(min(tb, _round_up(B, 128)), 128)
    b_pad = _round_up(B, tb)
    xT = jnp.zeros((d_pad, b_pad), jnp.float32)
    xT = xT.at[:num_inputs, :B].set(x.T)
    n_blocks = b_pad // tb

    # --- VMEM budget: double-buffered in/out act tiles + resident params ----
    tile_bytes = d_pad * tb * 4
    resident_bytes = NUM_LAYERS * d_pad * d_pad * 2 + NUM_LAYERS * d_pad * 4
    vmem_limit = min(32 << 20,                       # stay inside v7x default
                     max(16 << 20, 8 * tile_bytes + 4 * resident_bytes + (2 << 20)))

    outT = pl.pallas_call(
        mlp8_kernel,
        out_shape=jax.ShapeDtypeStruct((d_pad, b_pad), jnp.float32),
        grid_spec=pltpu.PrefetchScalarGridSpec(
            num_scalar_prefetch=0,
            grid=(n_blocks,),
            in_specs=[
                pl.BlockSpec((d_pad, tb), lambda i: (0, i)),            # x^T tile
                pl.BlockSpec((NUM_LAYERS, d_pad, d_pad),
                             lambda i: (0, 0, 0)),                      # weights (resident)
                pl.BlockSpec((NUM_LAYERS, d_pad, 1),
                             lambda i: (0, 0, 0)),                      # biases  (resident)
            ],
            out_specs=pl.BlockSpec((d_pad, tb), lambda i: (0, i)),      # out^T tile
        ),
        compiler_params=pltpu.CompilerParams(
            dimension_semantics=("parallel",),
            vmem_limit_bytes=vmem_limit,
        ),
    )(xT, w_slab, b_slab)

    return outT[:num_outputs, :B].T


def init_params(key, num_inputs, num_outputs, hidden_size=HIDDEN):
    """PyTorch-style uniform(-1/sqrt(fan_in), 1/sqrt(fan_in)) init."""
    dims = [num_inputs] + [hidden_size] * 9 + [num_outputs]
    weights, biases = [], []
    for i in range(NUM_LAYERS):
        fan_in, fan_out = dims[i], dims[i + 1]
        key, kw, kb = jax.random.split(key, 3)
        bound = 1.0 / jnp.sqrt(jnp.float32(fan_in))
        w = jax.random.uniform(kw, (fan_in, fan_out), jnp.float32, -bound, bound)
        b = jax.random.uniform(kb, (fan_out,), jnp.float32, -bound, bound)
        weights.append(w)
        biases.append(b)
    return weights, biases


def reference_forward(x, weights, biases):
    h = jnp.dot(x, weights[0]) + biases[0]
    for i in range(1, NUM_LAYERS):
        h = jnp.dot(jnp.tanh(h), weights[i]) + biases[i]
    return h


if __name__ == "__main__":
    num_inputs, num_outputs, batch = 8, 4, 2

    key = jax.random.PRNGKey(0)
    key, kx = jax.random.split(key)
    x = jax.random.normal(kx, (batch, num_inputs), jnp.float32)

    weights, biases = init_params(key, num_inputs, num_outputs)

    out = mlp8_forward(x, weights, biases)
    out = jax.block_until_ready(out)

    ref = reference_forward(x, weights, biases)
    assert out.shape == (batch, num_outputs)
    # bf16 matmul operands (f32 accumulation) -> loosened tolerance vs f32 ref.
    assert jnp.allclose(out, ref, atol=5e-2, rtol=5e-2), (
        f"max abs err {jnp.max(jnp.abs(out - ref))}")

    print("KERNEL_OK")
</pallas_src>

<mosaic_0001>
module attributes {stable_mosaic.version = 11 : i64} {
  func.func @mlp8_kernel(%arg0: i32, %arg1: memref<32x128xf32, #tpu.memory_space<vmem>>, %arg2: memref<10x32x32xbf16, #tpu.memory_space<vmem>>, %arg3: memref<10x32x1xf32, #tpu.memory_space<vmem>>, %arg4: memref<32x128xf32, #tpu.memory_space<vmem>>) attributes {dimension_semantics = [#tpu.dimension_semantics<parallel>], iteration_bounds = array<i64: 1>, scalar_prefetch = 0 : i64, scratch_operands = 0 : i64, tpu.core_type = #tpu.core_type<tc>, window_params = [{transform_indices = @transform_0, window_bounds = array<i64: 32, 128>}, {pipeline_mode = #tpu.pipeline_mode<synchronous>, transform_indices = @transform_1, window_bounds = array<i64: 10, 32, 32>}, {pipeline_mode = #tpu.pipeline_mode<synchronous>, transform_indices = @transform_2, window_bounds = array<i64: 10, 32, 1>}, {transform_indices = @transform_3, window_bounds = array<i64: 32, 128>}]} {
    %c0 = arith.constant 0 : index
    %c0_0 = arith.constant 0 : index
    %0 = vector.load %arg1[%c0, %c0_0] : memref<32x128xf32, #tpu.memory_space<vmem>>, vector<32x128xf32>
    %c0_1 = arith.constant 0 : index
    %c0_2 = arith.constant 0 : index
    %c0_3 = arith.constant 0 : index
    %1 = vector.load %arg2[%c0_1, %c0_2, %c0_3] : memref<10x32x32xbf16, #tpu.memory_space<vmem>>, vector<1x32x32xbf16>
    %2 = vector.shape_cast %1 : vector<1x32x32xbf16> to vector<32x32xbf16>
    %c0_4 = arith.constant 0 : index
    %c0_5 = arith.constant 0 : index
    %c0_6 = arith.constant 0 : index
    %3 = vector.load %arg3[%c0_4, %c0_5, %c0_6] : memref<10x32x1xf32, #tpu.memory_space<vmem>>, vector<1x32x1xf32>
    %4 = vector.shape_cast %3 : vector<1x32x1xf32> to vector<32x1xf32>
    %5 = arith.truncf %0 : vector<32x128xf32> to vector<32x128xbf16>
    %cst = arith.constant dense<0.000000e+00> : vector<32x128xf32>
    %6 = tpu.matmul %2, %5, %cst {dimension_numbers = #tpu.dot_dimension_numbers<[1], [0], [0], [1], [0, 0, 1, 1], [], []>} : vector<32x32xbf16>, vector<32x128xbf16>, vector<32x128xf32> -> vector<32x128xf32>
    %7 = vector.broadcast %4 : vector<32x1xf32> to vector<32x128xf32>
    %8 = arith.addf %6, %7 : vector<32x128xf32>
    %9 = math.tanh %8 : vector<32x128xf32>
    %c1 = arith.constant 1 : index
    %c0_7 = arith.constant 0 : index
    %c0_8 = arith.constant 0 : index
    %10 = vector.load %arg2[%c1, %c0_7, %c0_8] : memref<10x32x32xbf16, #tpu.memory_space<vmem>>, vector<1x32x32xbf16>
    %11 = vector.shape_cast %10 : vector<1x32x32xbf16> to vector<32x32xbf16>
    %c1_9 = arith.constant 1 : index
    %c0_10 = arith.constant 0 : index
    %c0_11 = arith.constant 0 : index
    %12 = vector.load %arg3[%c1_9, %c0_10, %c0_11] : memref<10x32x1xf32, #tpu.memory_space<vmem>>, vector<1x32x1xf32>
    %13 = vector.shape_cast %12 : vector<1x32x1xf32> to vector<32x1xf32>
    %14 = arith.truncf %9 : vector<32x128xf32> to vector<32x128xbf16>
    %cst_12 = arith.constant dense<0.000000e+00> : vector<32x128xf32>
    %15 = tpu.matmul %11, %14, %cst_12 {dimension_numbers = #tpu.dot_dimension_numbers<[1], [0], [0], [1], [0, 0, 1, 1], [], []>} : vector<32x32xbf16>, vector<32x128xbf16>, vector<32x128xf32> -> vector<32x128xf32>
    %16 = vector.broadcast %13 : vector<32x1xf32> to vector<32x128xf32>
    %17 = arith.addf %15, %16 : vector<32x128xf32>
    %18 = math.tanh %17 : vector<32x128xf32>
    %c2 = arith.constant 2 : index
    %c0_13 = arith.constant 0 : index
    %c0_14 = arith.constant 0 : index
    %19 = vector.load %arg2[%c2, %c0_13, %c0_14] : memref<10x32x32xbf16, #tpu.memory_space<vmem>>, vector<1x32x32xbf16>
    %20 = vector.shape_cast %19 : vector<1x32x32xbf16> to vector<32x32xbf16>
    %c2_15 = arith.constant 2 : index
    %c0_16 = arith.constant 0 : index
    %c0_17 = arith.constant 0 : index
    %21 = vector.load %arg3[%c2_15, %c0_16, %c0_17] : memref<10x32x1xf32, #tpu.memory_space<vmem>>, vector<1x32x1xf32>
    %22 = vector.shape_cast %21 : vector<1x32x1xf32> to vector<32x1xf32>
    %23 = arith.truncf %18 : vector<32x128xf32> to vector<32x128xbf16>
    %cst_18 = arith.constant dense<0.000000e+00> : vector<32x128xf32>
    %24 = tpu.matmul %20, %23, %cst_18 {dimension_numbers = #tpu.dot_dimension_numbers<[1], [0], [0], [1], [0, 0, 1, 1], [], []>} : vector<32x32xbf16>, vector<32x128xbf16>, vector<32x128xf32> -> vector<32x128xf32>
    %25 = vector.broadcast %22 : vector<32x1xf32> to vector<32x128xf32>
    %26 = arith.addf %24, %25 : vector<32x128xf32>
    %27 = math.tanh %26 : vector<32x128xf32>
    %c3 = arith.constant 3 : index
    %c0_19 = arith.constant 0 : index
    %c0_20 = arith.constant 0 : index
    %28 = vector.load %arg2[%c3, %c0_19, %c0_20] : memref<10x32x32xbf16, #tpu.memory_space<vmem>>, vector<1x32x32xbf16>
    %29 = vector.shape_cast %28 : vector<1x32x32xbf16> to vector<32x32xbf16>
    %c3_21 = arith.constant 3 : index
    %c0_22 = arith.constant 0 : index
    %c0_23 = arith.constant 0 : index
    %30 = vector.load %arg3[%c3_21, %c0_22, %c0_23] : memref<10x32x1xf32, #tpu.memory_space<vmem>>, vector<1x32x1xf32>
    %31 = vector.shape_cast %30 : vector<1x32x1xf32> to vector<32x1xf32>
    %32 = arith.truncf %27 : vector<32x128xf32> to vector<32x128xbf16>
    %cst_24 = arith.constant dense<0.000000e+00> : vector<32x128xf32>
    %33 = tpu.matmul %29, %32, %cst_24 {dimension_numbers = #tpu.dot_dimension_numbers<[1], [0], [0], [1], [0, 0, 1, 1], [], []>} : vector<32x32xbf16>, vector<32x128xbf16>, vector<32x128xf32> -> vector<32x128xf32>
    %34 = vector.broadcast %31 : vector<32x1xf32> to vector<32x128xf32>
    %35 = arith.addf %33, %34 : vector<32x128xf32>
    %36 = math.tanh %35 : vector<32x128xf32>
    %c4 = arith.constant 4 : index
    %c0_25 = arith.constant 0 : index
    %c0_26 = arith.constant 0 : index
    %37 = vector.load %arg2[%c4, %c0_25, %c0_26] : memref<10x32x32xbf16, #tpu.memory_space<vmem>>, vector<1x32x32xbf16>
    %38 = vector.shape_cast %37 : vector<1x32x32xbf16> to vector<32x32xbf16>
    %c4_27 = arith.constant 4 : index
    %c0_28 = arith.constant 0 : index
    %c0_29 = arith.constant 0 : index
    %39 = vector.load %arg3[%c4_27, %c0_28, %c0_29] : memref<10x32x1xf32, #tpu.memory_space<vmem>>, vector<1x32x1xf32>
    %40 = vector.shape_cast %39 : vector<1x32x1xf32> to vector<32x1xf32>
    %41 = arith.truncf %36 : vector<32x128xf32> to vector<32x128xbf16>
    %cst_30 = arith.constant dense<0.000000e+00> : vector<32x128xf32>
    %42 = tpu.matmul %38, %41, %cst_30 {dimension_numbers = #tpu.dot_dimension_numbers<[1], [0], [0], [1], [0, 0, 1, 1], [], []>} : vector<32x32xbf16>, vector<32x128xbf16>, vector<32x128xf32> -> vector<32x128xf32>
    %43 = vector.broadcast %40 : vector<32x1xf32> to vector<32x128xf32>
    %44 = arith.addf %42, %43 : vector<32x128xf32>
    %45 = math.tanh %44 : vector<32x128xf32>
    %c5 = arith.constant 5 : index
    %c0_31 = arith.constant 0 : index
    %c0_32 = arith.constant 0 : index
    %46 = vector.load %arg2[%c5, %c0_31, %c0_32] : memref<10x32x32xbf16, #tpu.memory_space<vmem>>, vector<1x32x32xbf16>
    %47 = vector.shape_cast %46 : vector<1x32x32xbf16> to vector<32x32xbf16>
    %c5_33 = arith.constant 5 : index
    %c0_34 = arith.constant 0 : index
    %c0_35 = arith.constant 0 : index
    %48 = vector.load %arg3[%c5_33, %c0_34, %c0_35] : memref<10x32x1xf32, #tpu.memory_space<vmem>>, vector<1x32x1xf32>
    %49 = vector.shape_cast %48 : vector<1x32x1xf32> to vector<32x1xf32>
    %50 = arith.truncf %45 : vector<32x128xf32> to vector<32x128xbf16>
    %cst_36 = arith.constant dense<0.000000e+00> : vector<32x128xf32>
    %51 = tpu.matmul %47, %50, %cst_36 {dimension_numbers = #tpu.dot_dimension_numbers<[1], [0], [0], [1], [0, 0, 1, 1], [], []>} : vector<32x32xbf16>, vector<32x128xbf16>, vector<32x128xf32> -> vector<32x128xf32>
    %52 = vector.broadcast %49 : vector<32x1xf32> to vector<32x128xf32>
    %53 = arith.addf %51, %52 : vector<32x128xf32>
    %54 = math.tanh %53 : vector<32x128xf32>
    %c6 = arith.constant 6 : index
    %c0_37 = arith.constant 0 : index
    %c0_38 = arith.constant 0 : index
    %55 = vector.load %arg2[%c6, %c0_37, %c0_38] : memref<10x32x32xbf16, #tpu.memory_space<vmem>>, vector<1x32x32xbf16>
    %56 = vector.shape_cast %55 : vector<1x32x32xbf16> to vector<32x32xbf16>
    %c6_39 = arith.constant 6 : index
    %c0_40 = arith.constant 0 : index
    %c0_41 = arith.constant 0 : index
    %57 = vector.load %arg3[%c6_39, %c0_40, %c0_41] : memref<10x32x1xf32, #tpu.memory_space<vmem>>, vector<1x32x1xf32>
    %58 = vector.shape_cast %57 : vector<1x32x1xf32> to vector<32x1xf32>
    %59 = arith.truncf %54 : vector<32x128xf32> to vector<32x128xbf16>
    %cst_42 = arith.constant dense<0.000000e+00> : vector<32x128xf32>
    %60 = tpu.matmul %56, %59, %cst_42 {dimension_numbers = #tpu.dot_dimension_numbers<[1], [0], [0], [1], [0, 0, 1, 1], [], []>} : vector<32x32xbf16>, vector<32x128xbf16>, vector<32x128xf32> -> vector<32x128xf32>
    %61 = vector.broadcast %58 : vector<32x1xf32> to vector<32x128xf32>
    %62 = arith.addf %60, %61 : vector<32x128xf32>
    %63 = math.tanh %62 : vector<32x128xf32>
    %c7 = arith.constant 7 : index
    %c0_43 = arith.constant 0 : index
    %c0_44 = arith.constant 0 : index
    %64 = vector.load %arg2[%c7, %c0_43, %c0_44] : memref<10x32x32xbf16, #tpu.memory_space<vmem>>, vector<1x32x32xbf16>
    %65 = vector.shape_cast %64 : vector<1x32x32xbf16> to vector<32x32xbf16>
    %c7_45 = arith.constant 7 : index
    %c0_46 = arith.constant 0 : index
    %c0_47 = arith.constant 0 : index
    %66 = vector.load %arg3[%c7_45, %c0_46, %c0_47] : memref<10x32x1xf32, #tpu.memory_space<vmem>>, vector<1x32x1xf32>
    %67 = vector.shape_cast %66 : vector<1x32x1xf32> to vector<32x1xf32>
    %68 = arith.truncf %63 : vector<32x128xf32> to vector<32x128xbf16>
    %cst_48 = arith.constant dense<0.000000e+00> : vector<32x128xf32>
    %69 = tpu.matmul %65, %68, %cst_48 {dimension_numbers = #tpu.dot_dimension_numbers<[1], [0], [0], [1], [0, 0, 1, 1], [], []>} : vector<32x32xbf16>, vector<32x128xbf16>, vector<32x128xf32> -> vector<32x128xf32>
    %70 = vector.broadcast %67 : vector<32x1xf32> to vector<32x128xf32>
    %71 = arith.addf %69, %70 : vector<32x128xf32>
    %72 = math.tanh %71 : vector<32x128xf32>
    %c8 = arith.constant 8 : index
    %c0_49 = arith.constant 0 : index
    %c0_50 = arith.constant 0 : index
    %73 = vector.load %arg2[%c8, %c0_49, %c0_50] : memref<10x32x32xbf16, #tpu.memory_space<vmem>>, vector<1x32x32xbf16>
    %74 = vector.shape_cast %73 : vector<1x32x32xbf16> to vector<32x32xbf16>
    %c8_51 = arith.constant 8 : index
    %c0_52 = arith.constant 0 : index
    %c0_53 = arith.constant 0 : index
    %75 = vector.load %arg3[%c8_51, %c0_52, %c0_53] : memref<10x32x1xf32, #tpu.memory_space<vmem>>, vector<1x32x1xf32>
    %76 = vector.shape_cast %75 : vector<1x32x1xf32> to vector<32x1xf32>
    %77 = arith.truncf %72 : vector<32x128xf32> to vector<32x128xbf16>
    %cst_54 = arith.constant dense<0.000000e+00> : vector<32x128xf32>
    %78 = tpu.matmul %74, %77, %cst_54 {dimension_numbers = #tpu.dot_dimension_numbers<[1], [0], [0], [1], [0, 0, 1, 1], [], []>} : vector<32x32xbf16>, vector<32x128xbf16>, vector<32x128xf32> -> vector<32x128xf32>
    %79 = vector.broadcast %76 : vector<32x1xf32> to vector<32x128xf32>
    %80 = arith.addf %78, %79 : vector<32x128xf32>
    %81 = math.tanh %80 : vector<32x128xf32>
    %c9 = arith.constant 9 : index
    %c0_55 = arith.constant 0 : index
    %c0_56 = arith.constant 0 : index
    %82 = vector.load %arg2[%c9, %c0_55, %c0_56] : memref<10x32x32xbf16, #tpu.memory_space<vmem>>, vector<1x32x32xbf16>
    %83 = vector.shape_cast %82 : vector<1x32x32xbf16> to vector<32x32xbf16>
    %c9_57 = arith.constant 9 : index
    %c0_58 = arith.constant 0 : index
    %c0_59 = arith.constant 0 : index
    %84 = vector.load %arg3[%c9_57, %c0_58, %c0_59] : memref<10x32x1xf32, #tpu.memory_space<vmem>>, vector<1x32x1xf32>
    %85 = vector.shape_cast %84 : vector<1x32x1xf32> to vector<32x1xf32>
    %86 = arith.truncf %81 : vector<32x128xf32> to vector<32x128xbf16>
    %cst_60 = arith.constant dense<0.000000e+00> : vector<32x128xf32>
    %87 = tpu.matmul %83, %86, %cst_60 {dimension_numbers = #tpu.dot_dimension_numbers<[1], [0], [0], [1], [0, 0, 1, 1], [], []>} : vector<32x32xbf16>, vector<32x128xbf16>, vector<32x128xf32> -> vector<32x128xf32>
    %88 = vector.broadcast %85 : vector<32x1xf32> to vector<32x128xf32>
    %89 = arith.addf %87, %88 : vector<32x128xf32>
    %c0_61 = arith.constant 0 : index
    %c0_62 = arith.constant 0 : index
    %90 = vector.load %arg4[%c0_61, %c0_62] : memref<32x128xf32, #tpu.memory_space<vmem>>, vector<32x128xf32>
    tpu.vector_store %arg4[%c0_61, %c0_62], %89 {strides = array<i32>} : memref<32x128xf32, #tpu.memory_space<vmem>>, vector<32x128xf32>,
    return
  }
  func.func @transform_0(%arg0: i32) -> (i32, i32) {
    %c0_i32 = arith.constant 0 : i32
    %c0_i32_0 = arith.constant 0 : i32
    return %c0_i32, %arg0 : i32, i32
  }
  func.func @transform_1(%arg0: i32) -> (i32, i32, i32) {
    %c0_i32 = arith.constant 0 : i32
    %c0_i32_0 = arith.constant 0 : i32
    %c0_i32_1 = arith.constant 0 : i32
    %c0_i32_2 = arith.constant 0 : i32
    return %c0_i32, %c0_i32_0, %c0_i32_1 : i32, i32, i32
  }
  func.func @transform_2(%arg0: i32) -> (i32, i32, i32) {
    %c0_i32 = arith.constant 0 : i32
    %c0_i32_0 = arith.constant 0 : i32
    %c0_i32_1 = arith.constant 0 : i32
    %c0_i32_2 = arith.constant 0 : i32
    return %c0_i32, %c0_i32_0, %c0_i32_1 : i32, i32, i32
  }
  func.func @transform_3(%arg0: i32) -> (i32, i32) {
    %c0_i32 = arith.constant 0 : i32
    %c0_i32_0 = arith.constant 0 : i32
    return %c0_i32, %arg0 : i32, i32
  }
}

</mosaic_0001>

<llo_original>
// kernel: tpu_custom_call.1
$region0: #{tpu_custom_call.1}
  #allocation0 [shape = 'u32[]', space=smem, size = 0x4, offset = 0x4, fixed_abs, tag = 'smem constant byte address 0x4 - core index']
  #allocation1 [shape = 'u32[144,128]{1,0:T(1,128)}', space=vmem, size = 0x12000, scoped, tag = 'internal scratch']
  %s0 = inlined_call_operand.vmem [shape: f32[32,128], index: 0, kind: input, shape index: {}]
  %s1 = inlined_call_operand.vmem [shape: bf16[10,32,32], index: 1, kind: input, shape index: {}]
  %s2 = inlined_call_operand.vmem [shape: f32[10,32,1], index: 2, kind: input, shape index: {}]
  %s3 = inlined_call_operand.hbm [shape: f32[32,128], index: 3, kind: output, shape index: {}]
  %s4 = sld [smem:[#allocation0]]
  $region22: #{tpu_custom_call.1} parent=0
    _
  %s6 = ssub.s32 1, %s4
  %s7 = scalar_select 0, %s6, %s4
  $region1: #{tpu_custom_call.1} parent=0
    #allocation2 [shape = 'u8[16384]{0}', space=vmem, size = 0x4000, scoped, tag = 'output window, operand 0, single buffered']
    #allocation3 [shape = 's32[1]{0}', space=sflag, size = 0x4, scoped, tag = 'scoped memory for tpu_custom_call.1']
    %8 = vsyncpa [#allocation3], 0
    // Predicated region
    $region2: #{tpu_custom_call.1} parent=1 // pred_check
      _
    $region3: #{tpu_custom_call.1} parent=1 // pred_check_branch
      %10 = sbr.rel (0) target = $region5
    $region4: #{tpu_custom_call.1} parent=1 // pred_region
      _
    $region5: #{tpu_custom_call.1} parent=1 // pred_fallthru
      _
    // Predicated region
    $region6: #{tpu_custom_call.1} parent=1 // pred_check
      _
    $region7: #{tpu_custom_call.1} parent=1 // pred_check_branch
      %12 = sbr.rel (0) target = $region9
    $region8: #{tpu_custom_call.1} parent=1 // pred_region
      _
    $region9: #{tpu_custom_call.1} parent=1 // pred_fallthru
      _
    // Predicated region
    $region10: #{tpu_custom_call.1} parent=1 // pred_check
      _
    $region11: #{tpu_custom_call.1} parent=1 // pred_check_branch
      %14 = sbr.rel (0) target = $region13
    $region12: #{tpu_custom_call.1} parent=1 // pred_region
      _
    $region13: #{tpu_custom_call.1} parent=1 // pred_fallthru
      _
    %v16 = vld [vmem:[%s0] sm:$0xff]
    %v17 = vld [vmem:[%s0 + $0x8] sm:$0xff]
    %v18 = vld [vmem:[%s0 + $0x10] sm:$0xff]
    %v19 = vld [vmem:[%s0 + $0x18] sm:$0xff]
    %v20 = vld [vmem:[%s1] sm:$0xf]
    %v21 = vld [vmem:[%s1 + $0x4] sm:$0xf]
    %v22 = vld [vmem:[%s1 + $0x8] sm:$0xf]
    %v23 = vld [vmem:[%s1 + $0xc] sm:$0xf]
    %v24 = vld [vmem:[%s2] sm:$0xff]
    %v25 = vld [vmem:[%s2 + $0x8] sm:$0xff]
    %v26 = vld [vmem:[%s2 + $0x10] sm:$0xff]
    %v27 = vld [vmem:[%s2 + $0x18] sm:$0xff]
    %v28 = vpack.c.bf16 %v17, %v16
    %v29 = vpack.c.bf16 %v19, %v18
    %31 = vset.pattern.permute.xlu0 0
    %32 = vperm.xlu0 %31, %v24
    %v33 = vpop.permute.xlu0 %32
    %36 = vset.pattern.permute.xlu0 0
    %37 = vperm.xlu0 %36, %v25
    %v38 = vpop.permute.xlu0 %37
    %41 = vset.pattern.permute.xlu0 0
    %42 = vperm.xlu0 %41, %v26
    %v43 = vpop.permute.xlu0 %42
    %46 = vset.pattern.permute.xlu0 0
    %47 = vperm.xlu0 %46, %v27
    %v48 = vpop.permute.xlu0 %47
    %v54 = vunpack.c.l.b16 %v20
    %v55 = vunpack.c.l.b16 %v21
    %v56 = vunpack.c.l.b16 %v22
    %v57 = vunpack.c.l.b16 %v23
    %v58 = vpack.c.b16 %v55, %v54
    %v59 = vpack.c.b16 %v57, %v56
    %vm60 = vcmask 261120
    %v62 = vsel %vm60, %v58, 0
    %v65 = vsel %vm60, %v59, 0
    %67 = vmatprep.subr.bf16.mxu0 0
    %68 = vmatpush1.bf16.msra.mxu0 %v28
    %69 = vmatprep.subr.bf16.mxu0 0
    %70 = vmatpush1.bf16.msra.mxu0 %v29
    %71 = vmatprep.subr.bf16.mxu0 0
    %72 = vmatpush1.bf16.msra.mxu0 0
    %73 = vmatprep.subr.bf16.mxu0 0
    %74 = vmatpush1.bf16.msra.mxu0 0
    %75 = vmatprep.subr.bf16.mxu0 0
    %76 = vmatpush1.bf16.msra.mxu0 0
    %77 = vmatprep.subr.bf16.mxu0 0
    %78 = vmatpush1.bf16.msra.mxu0 0
    %79 = vmatprep.subr.bf16.mxu0 0
    %80 = vmatpush1.bf16.msra.mxu0 0
    %81 = vmatprep.subr.bf16.mxu0 0
    %82 = vmatpush1.bf16.msra.mxu0 0
    %83 = vmatprep.subr.bf16.mxu0 0
    %84 = vmatpush1.bf16.msra.mxu0 0
    %85 = vmatprep.subr.bf16.mxu0 0
    %86 = vmatpush1.bf16.msra.mxu0 0
    %87 = vmatprep.subr.bf16.mxu0 0
    %88 = vmatpush1.bf16.msra.mxu0 0
    %89 = vmatprep.subr.bf16.mxu0 0
    %90 = vmatpush1.bf16.msra.mxu0 0
    %91 = vmatprep.subr.bf16.mxu0 0
    %92 = vmatpush1.bf16.msra.mxu0 0
    %93 = vmatprep.subr.bf16.mxu0 0
    %94 = vmatpush1.bf16.msra.mxu0 0
    %95 = vmatprep.subr.bf16.mxu0 0
    %96 = vmatpush1.bf16.msra.mxu0 0
    %97 = vmatprep.subr.bf16.mxu0 0
    %98 = vmatpush1.bf16.msra.mxu0 0
    %99 = vmatprep.mubr.bf16.mxu0 0
    %100 = vmatmul.mubr.bf16.gmra.mrb[0].mxu0 %v62
    %v101 = vpop.f32.mrb[0].mxu0
    %v102 = vadd.f32 %v33, %v101
    %v103 = vpop.f32.mrb[0].mxu0
    %v104 = vpop.f32.mrb[0].mxu0
    %v105 = vadd.f32 %v38, %v104
    %v106 = vpop.f32.mrb[0].mxu0
    %107 = vmatprep.mubr.bf16.mxu0 0
    %108 = vmatmul.mubr.bf16.gmra.mrb[0].mxu0 %v65
    %v109 = vpop.f32.mrb[0].mxu0
    %v110 = vadd.f32 %v43, %v109
    %v111 = vpop.f32.mrb[0].mxu0
    %v112 = vpop.f32.mrb[0].mxu0
    %v113 = vadd.f32 %v48, %v112
    %v114 = vpop.f32.mrb[0].mxu0
    %115 = vdwg.mxu0
    %v116 = vtanh.pop %v102
    %v117 = vtanh.pop %v105
    %v118 = vtanh.pop %v110
    %v119 = vtanh.pop %v113
    %s120 = scalar_lea.vmem %s1, 16
    %v121 = vld [vmem:[%s120] sm:$0xf]
    %v122 = vld [vmem:[%s120 + $0x4] sm:$0xf]
    %v123 = vld [vmem:[%s120 + $0x8] sm:$0xf]
    %v124 = vld [vmem:[%s120 + $0xc] sm:$0xf]
    %s125 = scalar_lea.vmem %s2, 32
    %v126 = vld [vmem:[%s125] sm:$0xff]
    %v127 = vld [vmem:[%s125 + $0x8] sm:$0xff]
    %v128 = vld [vmem:[%s125 + $0x10] sm:$0xff]
    %v129 = vld [vmem:[%s125 + $0x18] sm:$0xff]
    %v130 = vpack.c.bf16 %v117, %v116
    %v131 = vpack.c.bf16 %v119, %v118
    %133 = vset.pattern.permute.xlu0 0
    %134 = vperm.xlu0 %133, %v126
    %v135 = vpop.permute.xlu0 %134
    %138 = vset.pattern.permute.xlu0 0
    %139 = vperm.xlu0 %138, %v127
    %v140 = vpop.permute.xlu0 %139
    %143 = vset.pattern.permute.xlu0 0
    %144 = vperm.xlu0 %143, %v128
    %v145 = vpop.permute.xlu0 %144
    %148 = vset.pattern.permute.xlu0 0
    %149 = vperm.xlu0 %148, %v129
    %v150 = vpop.permute.xlu0 %149
    %v156 = vunpack.c.l.b16 %v121
    %v157 = vunpack.c.l.b16 %v122
    %v158 = vunpack.c.l.b16 %v123
    %v159 = vunpack.c.l.b16 %v124
    %v160 = vpack.c.b16 %v157, %v156
    %v161 = vpack.c.b16 %v159, %v158
    %v163 = vsel %vm60, %v160, 0
    %v166 = vsel %vm60, %v161, 0
    %168 = vmatprep.subr.bf16.mxu0 0
    %169 = vmatpush1.bf16.msra.mxu0 %v130
    %170 = vmatprep.subr.bf16.mxu0 0
    %171 = vmatpush1.bf16.msra.mxu0 %v131
    %172 = vmatprep.subr.bf16.mxu0 0
    %173 = vmatpush1.bf16.msra.mxu0 0
    %174 = vmatprep.subr.bf16.mxu0 0
    %175 = vmatpush1.bf16.msra.mxu0 0
    %176 = vmatprep.subr.bf16.mxu0 0
    %177 = vmatpush1.bf16.msra.mxu0 0
    %178 = vmatprep.subr.bf16.mxu0 0
    %179 = vmatpush1.bf16.msra.mxu0 0
    %180 = vmatprep.subr.bf16.mxu0 0
    %181 = vmatpush1.bf16.msra.mxu0 0
    %182 = vmatprep.subr.bf16.mxu0 0
    %183 = vmatpush1.bf16.msra.mxu0 0
    %184 = vmatprep.subr.bf16.mxu0 0
    %185 = vmatpush1.bf16.msra.mxu0 0
    %186 = vmatprep.subr.bf16.mxu0 0
    %187 = vmatpush1.bf16.msra.mxu0 0
    %188 = vmatprep.subr.bf16.mxu0 0
    %189 = vmatpush1.bf16.msra.mxu0 0
    %190 = vmatprep.subr.bf16.mxu0 0
    %191 = vmatpush1.bf16.msra.mxu0 0
    %192 = vmatprep.subr.bf16.mxu0 0
    %193 = vmatpush1.bf16.msra.mxu0 0
    %194 = vmatprep.subr.bf16.mxu0 0
    %195 = vmatpush1.bf16.msra.mxu0 0
    %196 = vmatprep.subr.bf16.mxu0 0
    %197 = vmatpush1.bf16.msra.mxu0 0
    %198 = vmatprep.subr.bf16.mxu0 0
    %199 = vmatpush1.bf16.msra.mxu0 0
    %200 = vmatprep.mubr.bf16.mxu0 0
    %201 = vmatmul.mubr.bf16.gmra.mrb[0].mxu0 %v163
    %v202 = vpop.f32.mrb[0].mxu0
    %v203 = vadd.f32 %v135, %v202
    %v204 = vpop.f32.mrb[0].mxu0
    %v205 = vpop.f32.mrb[0].mxu0
    %v206 = vadd.f32 %v140, %v205
    %v207 = vpop.f32.mrb[0].mxu0
    %208 = vmatprep.mubr.bf16.mxu0 0
    %209 = vmatmul.mubr.bf16.gmra.mrb[0].mxu0 %v166
    %v210 = vpop.f32.mrb[0].mxu0
    %v211 = vadd.f32 %v145, %v210
    %v212 = vpop.f32.mrb[0].mxu0
    %v213 = vpop.f32.mrb[0].mxu0
    %v214 = vadd.f32 %v150, %v213
    %v215 = vpop.f32.mrb[0].mxu0
    %216 = vdwg.mxu0
    %v217 = vtanh.pop %v203
    %v218 = vtanh.pop %v206
    %v219 = vtanh.pop %v211
    %v220 = vtanh.pop %v214
    %s221 = scalar_lea.vmem %s1, 32
    %v222 = vld [vmem:[%s221] sm:$0xf]
    %v223 = vld [vmem:[%s221 + $0x4] sm:$0xf]
    %v224 = vld [vmem:[%s221 + $0x8] sm:$0xf]
    %v225 = vld [vmem:[%s221 + $0xc] sm:$0xf]
    %s226 = scalar_lea.vmem %s2, 64
    %v227 = vld [vmem:[%s226] sm:$0xff]
    %v228 = vld [vmem:[%s226 + $0x8] sm:$0xff]
    %v229 = vld [vmem:[%s226 + $0x10] sm:$0xff]
    %v230 = vld [vmem:[%s226 + $0x18] sm:$0xff]
    %v231 = vpack.c.bf16 %v218, %v217
    %v232 = vpack.c.bf16 %v220, %v219
    %234 = vset.pattern.permute.xlu0 0
    %235 = vperm.xlu0 %234, %v227
    %v236 = vpop.permute.xlu0 %235
    %239 = vset.pattern.permute.xlu0 0
    %240 = vperm.xlu0 %239, %v228
    %v241 = vpop.permute.xlu0 %240
    %244 = vset.pattern.permute.xlu0 0
    %245 = vperm.xlu0 %244, %v229
    %v246 = vpop.permute.xlu0 %245
    %249 = vset.pattern.permute.xlu0 0
    %250 = vperm.xlu0 %249, %v230
    %v251 = vpop.permute.xlu0 %250
    %v257 = vunpack.c.l.b16 %v222
    %v258 = vunpack.c.l.b16 %v223
    %v259 = vunpack.c.l.b16 %v224
    %v260 = vunpack.c.l.b16 %v225
    %v261 = vpack.c.b16 %v258, %v257
    %v262 = vpack.c.b16 %v260, %v259
    %v264 = vsel %vm60, %v261, 0
    %v267 = vsel %vm60, %v262, 0
    %269 = vmatprep.subr.bf16.mxu0 0
    %270 = vmatpush1.bf16.msra.mxu0 %v231
    %271 = vmatprep.subr.bf16.mxu0 0
    %272 = vmatpush1.bf16.msra.mxu0 %v232
    %273 = vmatprep.subr.bf16.mxu0 0
    %274 = vmatpush1.bf16.msra.mxu0 0
    %275 = vmatprep.subr.bf16.mxu0 0
    %276 = vmatpush1.bf16.msra.mxu0 0
    %277 = vmatprep.subr.bf16.mxu0 0
    %278 = vmatpush1.bf16.msra.mxu0 0
    %279 = vmatprep.subr.bf16.mxu0 0
    %280 = vmatpush1.bf16.msra.mxu0 0
    %281 = vmatprep.subr.bf16.mxu0 0
    %282 = vmatpush1.bf16.msra.mxu0 0
    %283 = vmatprep.subr.bf16.mxu0 0
    %284 = vmatpush1.bf16.msra.mxu0 0
    %285 = vmatprep.subr.bf16.mxu0 0
    %286 = vmatpush1.bf16.msra.mxu0 0
    %287 = vmatprep.subr.bf16.mxu0 0
    %288 = vmatpush1.bf16.msra.mxu0 0
    %289 = vmatprep.subr.bf16.mxu0 0
    %290 = vmatpush1.bf16.msra.mxu0 0
    %291 = vmatprep.subr.bf16.mxu0 0
    %292 = vmatpush1.bf16.msra.mxu0 0
    %293 = vmatprep.subr.bf16.mxu0 0
    %294 = vmatpush1.bf16.msra.mxu0 0
    %295 = vmatprep.subr.bf16.mxu0 0
    %296 = vmatpush1.bf16.msra.mxu0 0
    %297 = vmatprep.subr.bf16.mxu0 0
    %298 = vmatpush1.bf16.msra.mxu0 0
    %299 = vmatprep.subr.bf16.mxu0 0
    %300 = vmatpush1.bf16.msra.mxu0 0
    %301 = vmatprep.mubr.bf16.mxu0 0
    %302 = vmatmul.mubr.bf16.gmra.mrb[0].mxu0 %v264
    %v303 = vpop.f32.mrb[0].mxu0
    %v304 = vadd.f32 %v236, %v303
    %v305 = vpop.f32.mrb[0].mxu0
    %v306 = vpop.f32.mrb[0].mxu0
    %v307 = vadd.f32 %v241, %v306
    %v308 = vpop.f32.mrb[0].mxu0
    %309 = vmatprep.mubr.bf16.mxu0 0
    %310 = vmatmul.mubr.bf16.gmra.mrb[0].mxu0 %v267
    %v311 = vpop.f32.mrb[0].mxu0
    %v312 = vadd.f32 %v246, %v311
    %v313 = vpop.f32.mrb[0].mxu0
    %v314 = vpop.f32.mrb[0].mxu0
    %v315 = vadd.f32 %v251, %v314
    %v316 = vpop.f32.mrb[0].mxu0
    %317 = vdwg.mxu0
    %v318 = vtanh.pop %v304
    %v319 = vtanh.pop %v307
    %v320 = vtanh.pop %v312
    %v321 = vtanh.pop %v315
    %s322 = scalar_lea.vmem %s1, 48
    %v323 = vld [vmem:[%s322] sm:$0xf]
    %v324 = vld [vmem:[%s322 + $0x4] sm:$0xf]
    %v325 = vld [vmem:[%s322 + $0x8] sm:$0xf]
    %v326 = vld [vmem:[%s322 + $0xc] sm:$0xf]
    %s327 = scalar_lea.vmem %s2, 96
    %v328 = vld [vmem:[%s327] sm:$0xff]
    %v329 = vld [vmem:[%s327 + $0x8] sm:$0xff]
    %v330 = vld [vmem:[%s327 + $0x10] sm:$0xff]
    %v331 = vld [vmem:[%s327 + $0x18] sm:$0xff]
    %v332 = vpack.c.bf16 %v319, %v318
    %v333 = vpack.c.bf16 %v321, %v320
    %335 = vset.pattern.permute.xlu0 0
    %336 = vperm.xlu0 %335, %v328
    %v337 = vpop.permute.xlu0 %336
    %340 = vset.pattern.permute.xlu0 0
    %341 = vperm.xlu0 %340, %v329
    %v342 = vpop.permute.xlu0 %341
    %345 = vset.pattern.permute.xlu0 0
    %346 = vperm.xlu0 %345, %v330
    %v347 = vpop.permute.xlu0 %346
    %350 = vset.pattern.permute.xlu0 0
    %351 = vperm.xlu0 %350, %v331
    %v352 = vpop.permute.xlu0 %351
    %v358 = vunpack.c.l.b16 %v323
    %v359 = vunpack.c.l.b16 %v324
    %v360 = vunpack.c.l.b16 %v325
    %v361 = vunpack.c.l.b16 %v326
    %v362 = vpack.c.b16 %v359, %v358
    %v363 = vpack.c.b16 %v361, %v360
    %v365 = vsel %vm60, %v362, 0
    %v368 = vsel %vm60, %v363, 0
    %370 = vmatprep.subr.bf16.mxu0 0
    %371 = vmatpush1.bf16.msra.mxu0 %v332
    %372 = vmatprep.subr.bf16.mxu0 0
    %373 = vmatpush1.bf16.msra.mxu0 %v333
    %374 = vmatprep.subr.bf16.mxu0 0
    %375 = vmatpush1.bf16.msra.mxu0 0
    %376 = vmatprep.subr.bf16.mxu0 0
    %377 = vmatpush1.bf16.msra.mxu0 0
    %378 = vmatprep.subr.bf16.mxu0 0
    %379 = vmatpush1.bf16.msra.mxu0 0
    %380 = vmatprep.subr.bf16.mxu0 0
    %381 = vmatpush1.bf16.msra.mxu0 0
    %382 = vmatprep.subr.bf16.mxu0 0
    %383 = vmatpush1.bf16.msra.mxu0 0
    %384 = vmatprep.subr.bf16.mxu0 0
    %385 = vmatpush1.bf16.msra.mxu0 0
    %386 = vmatprep.subr.bf16.mxu0 0
    %387 = vmatpush1.bf16.msra.mxu0 0
    %388 = vmatprep.subr.bf16.mxu0 0
    %389 = vmatpush1.bf16.msra.mxu0 0
    %390 = vmatprep.subr.bf16.mxu0 0
    %391 = vmatpush1.bf16.msra.mxu0 0
    %392 = vmatprep.subr.bf16.mxu0 0
    %393 = vmatpush1.bf16.msra.mxu0 0
    %394 = vmatprep.subr.bf16.mxu0 0
    %395 = vmatpush1.bf16.msra.mxu0 0
    %396 = vmatprep.subr.bf16.mxu0 0
    %397 = vmatpush1.bf16.msra.mxu0 0
    %398 = vmatprep.subr.bf16.mxu0 0
    %399 = vmatpush1.bf16.msra.mxu0 0
    %400 = vmatprep.subr.bf16.mxu0 0
    %401 = vmatpush1.bf16.msra.mxu0 0
    %402 = vmatprep.mubr.bf16.mxu0 0
    %403 = vmatmul.mubr.bf16.gmra.mrb[0].mxu0 %v365
    %v404 = vpop.f32.mrb[0].mxu0
    %v405 = vadd.f32 %v337, %v404
    %v406 = vpop.f32.mrb[0].mxu0
    %v407 = vpop.f32.mrb[0].mxu0
    %v408 = vadd.f32 %v342, %v407
    %v409 = vpop.f32.mrb[0].mxu0
    %410 = vmatprep.mubr.bf16.mxu0 0
    %411 = vmatmul.mubr.bf16.gmra.mrb[0].mxu0 %v368
    %v412 = vpop.f32.mrb[0].mxu0
    %v413 = vadd.f32 %v347, %v412
    %v414 = vpop.f32.mrb[0].mxu0
    %v415 = vpop.f32.mrb[0].mxu0
    %v416 = vadd.f32 %v352, %v415
    %v417 = vpop.f32.mrb[0].mxu0
    %418 = vdwg.mxu0
    %v419 = vtanh.pop %v405
    %v420 = vtanh.pop %v408
    %v421 = vtanh.pop %v413
    %v422 = vtanh.pop %v416
    %s423 = scalar_lea.vmem %s1, 64
    %v424 = vld [vmem:[%s423] sm:$0xf]
    %v425 = vld [vmem:[%s423 + $0x4] sm:$0xf]
    %v426 = vld [vmem:[%s423 + $0x8] sm:$0xf]
    %v427 = vld [vmem:[%s423 + $0xc] sm:$0xf]
    %s428 = scalar_lea.vmem %s2, 128
    %v429 = vld [vmem:[%s428] sm:$0xff]
    %v430 = vld [vmem:[%s428 + $0x8] sm:$0xff]
    %v431 = vld [vmem:[%s428 + $0x10] sm:$0xff]
    %v432 = vld [vmem:[%s428 + $0x18] sm:$0xff]
    %v433 = vpack.c.bf16 %v420, %v419
    %v434 = vpack.c.bf16 %v422, %v421
    %436 = vset.pattern.permute.xlu0 0
    %437 = vperm.xlu0 %436, %v429
    %v438 = vpop.permute.xlu0 %437
    %441 = vset.pattern.permute.xlu0 0
    %442 = vperm.xlu0 %441, %v430
    %v443 = vpop.permute.xlu0 %442
    %446 = vset.pattern.permute.xlu0 0
    %447 = vperm.xlu0 %446, %v431
    %v448 = vpop.permute.xlu0 %447
    %451 = vset.pattern.permute.xlu0 0
    %452 = vperm.xlu0 %451, %v432
    %v453 = vpop.permute.xlu0 %452
    %v459 = vunpack.c.l.b16 %v424
    %v460 = vunpack.c.l.b16 %v425
    %v461 = vunpack.c.l.b16 %v426
    %v462 = vunpack.c.l.b16 %v427
    %v463 = vpack.c.b16 %v460, %v459
    %v464 = vpack.c.b16 %v462, %v461
    %v466 = vsel %vm60, %v463, 0
    %v469 = vsel %vm60, %v464, 0
    %471 = vmatprep.subr.bf16.mxu0 0
    %472 = vmatpush1.bf16.msra.mxu0 %v433
    %473 = vmatprep.subr.bf16.mxu0 0
    %474 = vmatpush1.bf16.msra.mxu0 %v434
    %475 = vmatprep.subr.bf16.mxu0 0
    %476 = vmatpush1.bf16.msra.mxu0 0
    %477 = vmatprep.subr.bf16.mxu0 0
    %478 = vmatpush1.bf16.msra.mxu0 0
    %479 = vmatprep.subr.bf16.mxu0 0
    %480 = vmatpush1.bf16.msra.mxu0 0
    %481 = vmatprep.subr.bf16.mxu0 0
    %482 = vmatpush1.bf16.msra.mxu0 0
    %483 = vmatprep.subr.bf16.mxu0 0
    %484 = vmatpush1.bf16.msra.mxu0 0
    %485 = vmatprep.subr.bf16.mxu0 0
    %486 = vmatpush1.bf16.msra.mxu0 0
    %487 = vmatprep.subr.bf16.mxu0 0
    %488 = vmatpush1.bf16.msra.mxu0 0
    %489 = vmatprep.subr.bf16.mxu0 0
    %490 = vmatpush1.bf16.msra.mxu0 0
    %491 = vmatprep.subr.bf16.mxu0 0
    %492 = vmatpush1.bf16.msra.mxu0 0
    %493 = vmatprep.subr.bf16.mxu0 0
    %494 = vmatpush1.bf16.msra.mxu0 0
    %495 = vmatprep.subr.bf16.mxu0 0
    %496 = vmatpush1.bf16.msra.mxu0 0
    %497 = vmatprep.subr.bf16.mxu0 0
    %498 = vmatpush1.bf16.msra.mxu0 0
    %499 = vmatprep.subr.bf16.mxu0 0
    %500 = vmatpush1.bf16.msra.mxu0 0
    %501 = vmatprep.subr.bf16.mxu0 0
    %502 = vmatpush1.bf16.msra.mxu0 0
    %503 = vmatprep.mubr.bf16.mxu0 0
    %504 = vmatmul.mubr.bf16.gmra.mrb[0].mxu0 %v466
    %v505 = vpop.f32.mrb[0].mxu0
    %v506 = vadd.f32 %v438, %v505
    %v507 = vpop.f32.mrb[0].mxu0
    %v508 = vpop.f32.mrb[0].mxu0
    %v509 = vadd.f32 %v443, %v508
    %v510 = vpop.f32.mrb[0].mxu0
    %511 = vmatprep.mubr.bf16.mxu0 0
    %512 = vmatmul.mubr.bf16.gmra.mrb[0].mxu0 %v469
    %v513 = vpop.f32.mrb[0].mxu0
    %v514 = vadd.f32 %v448, %v513
    %v515 = vpop.f32.mrb[0].mxu0
    %v516 = vpop.f32.mrb[0].mxu0
    %v517 = vadd.f32 %v453, %v516
    %v518 = vpop.f32.mrb[0].mxu0
    %519 = vdwg.mxu0
    %v520 = vtanh.pop %v506
    %v521 = vtanh.pop %v509
    %v522 = vtanh.pop %v514
    %v523 = vtanh.pop %v517
    %s524 = scalar_lea.vmem %s1, 80
    %v525 = vld [vmem:[%s524] sm:$0xf]
    %v526 = vld [vmem:[%s524 + $0x4] sm:$0xf]
    %v527 = vld [vmem:[%s524 + $0x8] sm:$0xf]
    %v528 = vld [vmem:[%s524 + $0xc] sm:$0xf]
    %s529 = scalar_lea.vmem %s2, 160
    %v530 = vld [vmem:[%s529] sm:$0xff]
    %v531 = vld [vmem:[%s529 + $0x8] sm:$0xff]
    %v532 = vld [vmem:[%s529 + $0x10] sm:$0xff]
    %v533 = vld [vmem:[%s529 + $0x18] sm:$0xff]
    %v534 = vpack.c.bf16 %v521, %v520
    %v535 = vpack.c.bf16 %v523, %v522
    %537 = vset.pattern.permute.xlu0 0
    %538 = vperm.xlu0 %537, %v530
    %v539 = vpop.permute.xlu0 %538
    %542 = vset.pattern.permute.xlu0 0
    %543 = vperm.xlu0 %542, %v531
    %v544 = vpop.permute.xlu0 %543
    %547 = vset.pattern.permute.xlu0 0
    %548 = vperm.xlu0 %547, %v532
    %v549 = vpop.permute.xlu0 %548
    %552 = vset.pattern.permute.xlu0 0
    %553 = vperm.xlu0 %552, %v533
    %v554 = vpop.permute.xlu0 %553
    %v560 = vunpack.c.l.b16 %v525
    %v561 = vunpack.c.l.b16 %v526
    %v562 = vunpack.c.l.b16 %v527
    %v563 = vunpack.c.l.b16 %v528
    %v564 = vpack.c.b16 %v561, %v560
    %v565 = vpack.c.b16 %v563, %v562
    %v567 = vsel %vm60, %v564, 0
    %v570 = vsel %vm60, %v565, 0
    %572 = vmatprep.subr.bf16.mxu0 0
    %573 = vmatpush1.bf16.msra.mxu0 %v534
    %574 = vmatprep.subr.bf16.mxu0 0
    %575 = vmatpush1.bf16.msra.mxu0 %v535
    %576 = vmatprep.subr.bf16.mxu0 0
    %577 = vmatpush1.bf16.msra.mxu0 0
    %578 = vmatprep.subr.bf16.mxu0 0
    %579 = vmatpush1.bf16.msra.mxu0 0
    %580 = vmatprep.subr.bf16.mxu0 0
    %581 = vmatpush1.bf16.msra.mxu0 0
    %582 = vmatprep.subr.bf16.mxu0 0
    %583 = vmatpush1.bf16.msra.mxu0 0
    %584 = vmatprep.subr.bf16.mxu0 0
    %585 = vmatpush1.bf16.msra.mxu0 0
    %586 = vmatprep.subr.bf16.mxu0 0
    %587 = vmatpush1.bf16.msra.mxu0 0
    %588 = vmatprep.subr.bf16.mxu0 0
    %589 = vmatpush1.bf16.msra.mxu0 0
    %590 = vmatprep.subr.bf16.mxu0 0
    %591 = vmatpush1.bf16.msra.mxu0 0
    %592 = vmatprep.subr.bf16.mxu0 0
    %593 = vmatpush1.bf16.msra.mxu0 0
    %594 = vmatprep.subr.bf16.mxu0 0
    %595 = vmatpush1.bf16.msra.mxu0 0
    %596 = vmatprep.subr.bf16.mxu0 0
    %597 = vmatpush1.bf16.msra.mxu0 0
    %598 = vmatprep.subr.bf16.mxu0 0
    %599 = vmatpush1.bf16.msra.mxu0 0
    %600 = vmatprep.subr.bf16.mxu0 0
    %601 = vmatpush1.bf16.msra.mxu0 0
    %602 = vmatprep.subr.bf16.mxu0 0
    %603 = vmatpush1.bf16.msra.mxu0 0
    %604 = vmatprep.mubr.bf16.mxu0 0
    %605 = vmatmul.mubr.bf16.gmra.mrb[0].mxu0 %v567
    %v606 = vpop.f32.mrb[0].mxu0
    %v607 = vadd.f32 %v539, %v606
    %v608 = vpop.f32.mrb[0].mxu0
    %v609 = vpop.f32.mrb[0].mxu0
    %v610 = vadd.f32 %v544, %v609
    %v611 = vpop.f32.mrb[0].mxu0
    %612 = vmatprep.mubr.bf16.mxu0 0
    %613 = vmatmul.mubr.bf16.gmra.mrb[0].mxu0 %v570
    %v614 = vpop.f32.mrb[0].mxu0
    %v615 = vadd.f32 %v549, %v614
    %v616 = vpop.f32.mrb[0].mxu0
    %v617 = vpop.f32.mrb[0].mxu0
    %v618 = vadd.f32 %v554, %v617
    %v619 = vpop.f32.mrb[0].mxu0
    %620 = vdwg.mxu0
    %v621 = vtanh.pop %v607
    %v622 = vtanh.pop %v610
    %v623 = vtanh.pop %v615
    %v624 = vtanh.pop %v618
    %s625 = scalar_lea.vmem %s1, 96
    %v626 = vld [vmem:[%s625] sm:$0xf]
    %v627 = vld [vmem:[%s625 + $0x4] sm:$0xf]
    %v628 = vld [vmem:[%s625 + $0x8] sm:$0xf]
    %v629 = vld [vmem:[%s625 + $0xc] sm:$0xf]
    %s630 = scalar_lea.vmem %s2, 192
    %v631 = vld [vmem:[%s630] sm:$0xff]
    %v632 = vld [vmem:[%s630 + $0x8] sm:$0xff]
    %v633 = vld [vmem:[%s630 + $0x10] sm:$0xff]
    %v634 = vld [vmem:[%s630 + $0x18] sm:$0xff]
    %v635 = vpack.c.bf16 %v622, %v621
    %v636 = vpack.c.bf16 %v624, %v623
    %638 = vset.pattern.permute.xlu0 0
    %639 = vperm.xlu0 %638, %v631
    %v640 = vpop.permute.xlu0 %639
    %643 = vset.pattern.permute.xlu0 0
    %644 = vperm.xlu0 %643, %v632
    %v645 = vpop.permute.xlu0 %644
    %648 = vset.pattern.permute.xlu0 0
    %649 = vperm.xlu0 %648, %v633
    %v650 = vpop.permute.xlu0 %649
    %653 = vset.pattern.permute.xlu0 0
    %654 = vperm.xlu0 %653, %v634
    %v655 = vpop.permute.xlu0 %654
    %v661 = vunpack.c.l.b16 %v626
    %v662 = vunpack.c.l.b16 %v627
    %v663 = vunpack.c.l.b16 %v628
    %v664 = vunpack.c.l.b16 %v629
    %v665 = vpack.c.b16 %v662, %v661
    %v666 = vpack.c.b16 %v664, %v663
    %v668 = vsel %vm60, %v665, 0
    %v671 = vsel %vm60, %v666, 0
    %673 = vmatprep.subr.bf16.mxu0 0
    %674 = vmatpush1.bf16.msra.mxu0 %v635
    %675 = vmatprep.subr.bf16.mxu0 0
    %676 = vmatpush1.bf16.msra.mxu0 %v636
    %677 = vmatprep.subr.bf16.mxu0 0
    %678 = vmatpush1.bf16.msra.mxu0 0
    %679 = vmatprep.subr.bf16.mxu0 0
    %680 = vmatpush1.bf16.msra.mxu0 0
    %681 = vmatprep.subr.bf16.mxu0 0
    %682 = vmatpush1.bf16.msra.mxu0 0
    %683 = vmatprep.subr.bf16.mxu0 0
    %684 = vmatpush1.bf16.msra.mxu0 0
    %685 = vmatprep.subr.bf16.mxu0 0
    %686 = vmatpush1.bf16.msra.mxu0 0
    %687 = vmatprep.subr.bf16.mxu0 0
    %688 = vmatpush1.bf16.msra.mxu0 0
    %689 = vmatprep.subr.bf16.mxu0 0
    %690 = vmatpush1.bf16.msra.mxu0 0
    %691 = vmatprep.subr.bf16.mxu0 0
    %692 = vmatpush1.bf16.msra.mxu0 0
    %693 = vmatprep.subr.bf16.mxu0 0
    %694 = vmatpush1.bf16.msra.mxu0 0
    %695 = vmatprep.subr.bf16.mxu0 0
    %696 = vmatpush1.bf16.msra.mxu0 0
    %697 = vmatprep.subr.bf16.mxu0 0
    %698 = vmatpush1.bf16.msra.mxu0 0
    %699 = vmatprep.subr.bf16.mxu0 0
    %700 = vmatpush1.bf16.msra.mxu0 0
    %701 = vmatprep.subr.bf16.mxu0 0
    %702 = vmatpush1.bf16.msra.mxu0 0
    %703 = vmatprep.subr.bf16.mxu0 0
    %704 = vmatpush1.bf16.msra.mxu0 0
    %705 = vmatprep.mubr.bf16.mxu0 0
    %706 = vmatmul.mubr.bf16.gmra.mrb[0].mxu0 %v668
    %v707 = vpop.f32.mrb[0].mxu0
    %v708 = vadd.f32 %v640, %v707
    %v709 = vpop.f32.mrb[0].mxu0
    %v710 = vpop.f32.mrb[0].mxu0
    %v711 = vadd.f32 %v645, %v710
    %v712 = vpop.f32.mrb[0].mxu0
    %713 = vmatprep.mubr.bf16.mxu0 0
    %714 = vmatmul.mubr.bf16.gmra.mrb[0].mxu0 %v671
    %v715 = vpop.f32.mrb[0].mxu0
    %v716 = vadd.f32 %v650, %v715
    %v717 = vpop.f32.mrb[0].mxu0
    %v718 = vpop.f32.mrb[0].mxu0
    %v719 = vadd.f32 %v655, %v718
    %v720 = vpop.f32.mrb[0].mxu0
    %721 = vdwg.mxu0
    %v722 = vtanh.pop %v708
    %v723 = vtanh.pop %v711
    %v724 = vtanh.pop %v716
    %v725 = vtanh.pop %v719
    %s726 = scalar_lea.vmem %s1, 112
    %v727 = vld [vmem:[%s726] sm:$0xf]
    %v728 = vld [vmem:[%s726 + $0x4] sm:$0xf]
    %v729 = vld [vmem:[%s726 + $0x8] sm:$0xf]
    %v730 = vld [vmem:[%s726 + $0xc] sm:$0xf]
    %s731 = scalar_lea.vmem %s2, 224
    %v732 = vld [vmem:[%s731] sm:$0xff]
    %v733 = vld [vmem:[%s731 + $0x8] sm:$0xff]
    %v734 = vld [vmem:[%s731 + $0x10] sm:$0xff]
    %v735 = vld [vmem:[%s731 + $0x18] sm:$0xff]
    %v736 = vpack.c.bf16 %v723, %v722
    %v737 = vpack.c.bf16 %v725, %v724
    %739 = vset.pattern.permute.xlu0 0
    %740 = vperm.xlu0 %739, %v732
    %v741 = vpop.permute.xlu0 %740
    %744 = vset.pattern.permute.xlu0 0
    %745 = vperm.xlu0 %744, %v733
    %v746 = vpop.permute.xlu0 %745
    %749 = vset.pattern.permute.xlu0 0
    %750 = vperm.xlu0 %749, %v734
    %v751 = vpop.permute.xlu0 %750
    %754 = vset.pattern.permute.xlu0 0
    %755 = vperm.xlu0 %754, %v735
    %v756 = vpop.permute.xlu0 %755
    %v762 = vunpack.c.l.b16 %v727
    %v763 = vunpack.c.l.b16 %v728
    %v764 = vunpack.c.l.b16 %v729
    %v765 = vunpack.c.l.b16 %v730
    %v766 = vpack.c.b16 %v763, %v762
    %v767 = vpack.c.b16 %v765, %v764
    %v769 = vsel %vm60, %v766, 0
    %v772 = vsel %vm60, %v767, 0
    %774 = vmatprep.subr.bf16.mxu0 0
    %775 = vmatpush1.bf16.msra.mxu0 %v736
    %776 = vmatprep.subr.bf16.mxu0 0
    %777 = vmatpush1.bf16.msra.mxu0 %v737
    %778 = vmatprep.subr.bf16.mxu0 0
    %779 = vmatpush1.bf16.msra.mxu0 0
    %780 = vmatprep.subr.bf16.mxu0 0
    %781 = vmatpush1.bf16.msra.mxu0 0
    %782 = vmatprep.subr.bf16.mxu0 0
    %783 = vmatpush1.bf16.msra.mxu0 0
    %784 = vmatprep.subr.bf16.mxu0 0
    %785 = vmatpush1.bf16.msra.mxu0 0
    %786 = vmatprep.subr.bf16.mxu0 0
    %787 = vmatpush1.bf16.msra.mxu0 0
    %788 = vmatprep.subr.bf16.mxu0 0
    %789 = vmatpush1.bf16.msra.mxu0 0
    %790 = vmatprep.subr.bf16.mxu0 0
    %791 = vmatpush1.bf16.msra.mxu0 0
    %792 = vmatprep.subr.bf16.mxu0 0
    %793 = vmatpush1.bf16.msra.mxu0 0
    %794 = vmatprep.subr.bf16.mxu0 0
    %795 = vmatpush1.bf16.msra.mxu0 0
    %796 = vmatprep.subr.bf16.mxu0 0
    %797 = vmatpush1.bf16.msra.mxu0 0
    %798 = vmatprep.subr.bf16.mxu0 0
    %799 = vmatpush1.bf16.msra.mxu0 0
    %800 = vmatprep.subr.bf16.mxu0 0
    %801 = vmatpush1.bf16.msra.mxu0 0
    %802 = vmatprep.subr.bf16.mxu0 0
    %803 = vmatpush1.bf16.msra.mxu0 0
    %804 = vmatprep.subr.bf16.mxu0 0
    %805 = vmatpush1.bf16.msra.mxu0 0
    %806 = vmatprep.mubr.bf16.mxu0 0
    %807 = vmatmul.mubr.bf16.gmra.mrb[0].mxu0 %v769
    %v808 = vpop.f32.mrb[0].mxu0
    %v809 = vadd.f32 %v741, %v808
    %v810 = vpop.f32.mrb[0].mxu0
    %v811 = vpop.f32.mrb[0].mxu0
    %v812 = vadd.f32 %v746, %v811
    %v813 = vpop.f32.mrb[0].mxu0
    %814 = vmatprep.mubr.bf16.mxu0 0
    %815 = vmatmul.mubr.bf16.gmra.mrb[0].mxu0 %v772
    %v816 = vpop.f32.mrb[0].mxu0
    %v817 = vadd.f32 %v751, %v816
    %v818 = vpop.f32.mrb[0].mxu0
    %v819 = vpop.f32.mrb[0].mxu0
    %v820 = vadd.f32 %v756, %v819
    %v821 = vpop.f32.mrb[0].mxu0
    %822 = vdwg.mxu0
    %v823 = vtanh.pop %v809
    %v824 = vtanh.pop %v812
    %v825 = vtanh.pop %v817
    %v826 = vtanh.pop %v820
    %s827 = scalar_lea.vmem %s1, 128
    %v828 = vld [vmem:[%s827] sm:$0xf]
    %v829 = vld [vmem:[%s827 + $0x4] sm:$0xf]
    %v830 = vld [vmem:[%s827 + $0x8] sm:$0xf]
    %v831 = vld [vmem:[%s827 + $0xc] sm:$0xf]
    %s832 = scalar_lea.vmem %s2, 256
    %v833 = vld [vmem:[%s832] sm:$0xff]
    %v834 = vld [vmem:[%s832 + $0x8] sm:$0xff]
    %v835 = vld [vmem:[%s832 + $0x10] sm:$0xff]
    %v836 = vld [vmem:[%s832 + $0x18] sm:$0xff]
    %v837 = vpack.c.bf16 %v824, %v823
    %v838 = vpack.c.bf16 %v826, %v825
    %840 = vset.pattern.permute.xlu0 0
    %841 = vperm.xlu0 %840, %v833
    %v842 = vpop.permute.xlu0 %841
    %845 = vset.pattern.permute.xlu0 0
    %846 = vperm.xlu0 %845, %v834
    %v847 = vpop.permute.xlu0 %846
    %850 = vset.pattern.permute.xlu0 0
    %851 = vperm.xlu0 %850, %v835
    %v852 = vpop.permute.xlu0 %851
    %855 = vset.pattern.permute.xlu0 0
    %856 = vperm.xlu0 %855, %v836
    %v857 = vpop.permute.xlu0 %856
    %v863 = vunpack.c.l.b16 %v828
    %v864 = vunpack.c.l.b16 %v829
    %v865 = vunpack.c.l.b16 %v830
    %v866 = vunpack.c.l.b16 %v831
    %v867 = vpack.c.b16 %v864, %v863
    %v868 = vpack.c.b16 %v866, %v865
    %v870 = vsel %vm60, %v867, 0
    %v873 = vsel %vm60, %v868, 0
    %875 = vmatprep.subr.bf16.mxu0 0
    %876 = vmatpush1.bf16.msra.mxu0 %v837
    %877 = vmatprep.subr.bf16.mxu0 0
    %878 = vmatpush1.bf16.msra.mxu0 %v838
    %879 = vmatprep.subr.bf16.mxu0 0
    %880 = vmatpush1.bf16.msra.mxu0 0
    %881 = vmatprep.subr.bf16.mxu0 0
    %882 = vmatpush1.bf16.msra.mxu0 0
    %883 = vmatprep.subr.bf16.mxu0 0
    %884 = vmatpush1.bf16.msra.mxu0 0
    %885 = vmatprep.subr.bf16.mxu0 0
    %886 = vmatpush1.bf16.msra.mxu0 0
    %887 = vmatprep.subr.bf16.mxu0 0
    %888 = vmatpush1.bf16.msra.mxu0 0
    %889 = vmatprep.subr.bf16.mxu0 0
    %890 = vmatpush1.bf16.msra.mxu0 0
    %891 = vmatprep.subr.bf16.mxu0 0
    %892 = vmatpush1.bf16.msra.mxu0 0
    %893 = vmatprep.subr.bf16.mxu0 0
    %894 = vmatpush1.bf16.msra.mxu0 0
    %895 = vmatprep.subr.bf16.mxu0 0
    %896 = vmatpush1.bf16.msra.mxu0 0
    %897 = vmatprep.subr.bf16.mxu0 0
    %898 = vmatpush1.bf16.msra.mxu0 0
    %899 = vmatprep.subr.bf16.mxu0 0
    %900 = vmatpush1.bf16.msra.mxu0 0
    %901 = vmatprep.subr.bf16.mxu0 0
    %902 = vmatpush1.bf16.msra.mxu0 0
    %903 = vmatprep.subr.bf16.mxu0 0
    %904 = vmatpush1.bf16.msra.mxu0 0
    %905 = vmatprep.subr.bf16.mxu0 0
    %906 = vmatpush1.bf16.msra.mxu0 0
    %907 = vmatprep.mubr.bf16.mxu0 0
    %908 = vmatmul.mubr.bf16.gmra.mrb[0].mxu0 %v870
    %v909 = vpop.f32.mrb[0].mxu0
    %v910 = vadd.f32 %v842, %v909
    %v911 = vpop.f32.mrb[0].mxu0
    %v912 = vpop.f32.mrb[0].mxu0
    %v913 = vadd.f32 %v847, %v912
    %v914 = vpop.f32.mrb[0].mxu0
    %915 = vmatprep.mubr.bf16.mxu0 0
    %916 = vmatmul.mubr.bf16.gmra.mrb[0].mxu0 %v873
    %v917 = vpop.f32.mrb[0].mxu0
    %v918 = vadd.f32 %v852, %v917
    %v919 = vpop.f32.mrb[0].mxu0
    %v920 = vpop.f32.mrb[0].mxu0
    %v921 = vadd.f32 %v857, %v920
    %v922 = vpop.f32.mrb[0].mxu0
    %923 = vdwg.mxu0
    %v924 = vtanh.pop %v910
    %v925 = vtanh.pop %v913
    %v926 = vtanh.pop %v918
    %v927 = vtanh.pop %v921
    %s928 = scalar_lea.vmem %s1, 144
    %v929 = vld [vmem:[%s928] sm:$0xf]
    %v930 = vld [vmem:[%s928 + $0x4] sm:$0xf]
    %v931 = vld [vmem:[%s928 + $0x8] sm:$0xf]
    %v932 = vld [vmem:[%s928 + $0xc] sm:$0xf]
    %s933 = scalar_lea.vmem %s2, 288
    %v934 = vld [vmem:[%s933] sm:$0xff]
    %v935 = vld [vmem:[%s933 + $0x8] sm:$0xff]
    %v936 = vld [vmem:[%s933 + $0x10] sm:$0xff]
    %v937 = vld [vmem:[%s933 + $0x18] sm:$0xff]
    %v938 = vpack.c.bf16 %v925, %v924
    %v939 = vpack.c.bf16 %v927, %v926
    %941 = vset.pattern.permute.xlu0 0
    %942 = vperm.xlu0 %941, %v934
    %v943 = vpop.permute.xlu0 %942
    %946 = vset.pattern.permute.xlu0 0
    %947 = vperm.xlu0 %946, %v935
    %v948 = vpop.permute.xlu0 %947
    %951 = vset.pattern.permute.xlu0 0
    %952 = vperm.xlu0 %951, %v936
    %v953 = vpop.permute.xlu0 %952
    %956 = vset.pattern.permute.xlu0 0
    %957 = vperm.xlu0 %956, %v937
    %v958 = vpop.permute.xlu0 %957
    %v964 = vunpack.c.l.b16 %v929
    %v965 = vunpack.c.l.b16 %v930
    %v966 = vunpack.c.l.b16 %v931
    %v967 = vunpack.c.l.b16 %v932
    %v968 = vpack.c.b16 %v965, %v964
    %v969 = vpack.c.b16 %v967, %v966
    %v971 = vsel %vm60, %v968, 0
    %v974 = vsel %vm60, %v969, 0
    %976 = vmatprep.subr.bf16.mxu0 0
    %977 = vmatpush1.bf16.msra.mxu0 %v938
    %978 = vmatprep.subr.bf16.mxu0 0
    %979 = vmatpush1.bf16.msra.mxu0 %v939
    %980 = vmatprep.subr.bf16.mxu0 0
    %981 = vmatpush1.bf16.msra.mxu0 0
    %982 = vmatprep.subr.bf16.mxu0 0
    %983 = vmatpush1.bf16.msra.mxu0 0
    %984 = vmatprep.subr.bf16.mxu0 0
    %985 = vmatpush1.bf16.msra.mxu0 0
    %986 = vmatprep.subr.bf16.mxu0 0
    %987 = vmatpush1.bf16.msra.mxu0 0
    %988 = vmatprep.subr.bf16.mxu0 0
    %989 = vmatpush1.bf16.msra.mxu0 0
    %990 = vmatprep.subr.bf16.mxu0 0
    %991 = vmatpush1.bf16.msra.mxu0 0
    %992 = vmatprep.subr.bf16.mxu0 0
    %993 = vmatpush1.bf16.msra.mxu0 0
    %994 = vmatprep.subr.bf16.mxu0 0
    %995 = vmatpush1.bf16.msra.mxu0 0
    %996 = vmatprep.subr.bf16.mxu0 0
    %997 = vmatpush1.bf16.msra.mxu0 0
    %998 = vmatprep.subr.bf16.mxu0 0
    %999 = vmatpush1.bf16.msra.mxu0 0
    %1000 = vmatprep.subr.bf16.mxu0 0
    %1001 = vmatpush1.bf16.msra.mxu0 0
    %1002 = vmatprep.subr.bf16.mxu0 0
    %1003 = vmatpush1.bf16.msra.mxu0 0
    %1004 = vmatprep.subr.bf16.mxu0 0
    %1005 = vmatpush1.bf16.msra.mxu0 0
    %1006 = vmatprep.subr.bf16.mxu0 0
    %1007 = vmatpush1.bf16.msra.mxu0 0
    %1008 = vmatprep.mubr.bf16.mxu0 0
    %1009 = vmatmul.mubr.bf16.gmra.mrb[0].mxu0 %v971
    %v1010 = vpop.f32.mrb[0].mxu0
    %v1011 = vadd.f32 %v943, %v1010
    %v1012 = vpop.f32.mrb[0].mxu0
    %v1013 = vpop.f32.mrb[0].mxu0
    %v1014 = vadd.f32 %v948, %v1013
    %v1015 = vpop.f32.mrb[0].mxu0
    %1016 = vmatprep.mubr.bf16.mxu0 0
    %1017 = vmatmul.mubr.bf16.gmra.mrb[0].mxu0 %v974
    %v1018 = vpop.f32.mrb[0].mxu0
    %v1019 = vadd.f32 %v953, %v1018
    %v1020 = vpop.f32.mrb[0].mxu0
    %v1021 = vpop.f32.mrb[0].mxu0
    %v1022 = vadd.f32 %v958, %v1021
    %v1023 = vpop.f32.mrb[0].mxu0
    %1024 = vdwg.mxu0
    %1025 = vst [vmem:[#allocation2] sm:$0xff] %v1011
    %1026 = vst [vmem:[#allocation2 + $0x8] sm:$0xff] %v1014
    %1027 = vst [vmem:[#allocation2 + $0x10] sm:$0xff] %v1019
    %1028 = vst [vmem:[#allocation2 + $0x18] sm:$0xff] %v1022
    // Predicated region
    $region14: #{tpu_custom_call.1} parent=1 // pred_check
      _
    $region15: #{tpu_custom_call.1} parent=1 // pred_check_branch
      %1030 = sbr.rel (0) target = $region17
    $region16: #{tpu_custom_call.1} parent=1 // pred_region
      %s1032 = ssub.s32 512, 512
      %1033 = vsyncadd [#allocation3], %s1032
      %s1034 = sshll.u32 [#allocation2], 4
      %s1035 = int_to_ptr.vmem [resolvable:$true] %s1034
      %1040 = dma.vmem_to_hbm [thread:$0]  %s1035, 512, %s3, [#allocation3], 128, 128, 8
    $region17: #{tpu_custom_call.1} parent=1 // pred_fallthru
      _
    // Predicated region
    $region18: #{tpu_custom_call.1} parent=1 // pred_check
      _
    $region19: #{tpu_custom_call.1} parent=1 // pred_check_branch
      %1042 = sbr.rel (0) target = $region21
    $region20: #{tpu_custom_call.1} parent=1 // pred_region
      %1043 = dma.done [#allocation3], 512
    $region21: #{tpu_custom_call.1} parent=1 // pred_fallthru
      _
    %1044 = vsyncpa [#allocation3], 1

</llo_original>
